<compile_context>
chip_gen: v6e
topology: v6e:2x2x1
jax: 0.10.0
libtpu: 0.0.40
codegen_flags: <defaults>
</compile_context>

<pallas_src>
import functools

import jax
import jax.numpy as jnp
from jax.experimental import pallas as pl
from jax.experimental.pallas import tpu as pltpu


def _round_up(x, m):
    return -(-x // m) * m


def _fused_kernel(x_ref, w_ref, shift_ref, o_ref, *, Wp, R, nh, dmax, dilations):
    # x_ref:     (1, Cin, Lflat)   flat-padded channels-major image, bf16
    # w_ref:     (Cout_pad, K)     fused block-diagonal weights, BN scale folded, bf16
    # shift_ref: (Cout_pad, 1)     folded conv bias + BN shift, f32
    # o_ref:     (1, Cout_pad, R)  channels-major tile, extended spatial rows on lanes, bf16
    row0 = 0 if nh == 1 else pl.program_id(1) * R          # flat offset of this H-tile

    # im2col slab, transposed: K on sublanes, extended rows on lanes.  Each (d, kh, kw)
    # tap is one contiguous (Cin, R) window of the flat image (static offset when nh==1).
    pieces = []
    for d in dilations:                                     # static python ints
        for kh in range(3):
            for kw in range(3):
                off = dmax + (dmax + (kh - 1) * d) * Wp + (kw - 1) * d   # >= 0, static
                pieces.append(x_ref[0, :, pl.ds(row0 + off, R)])         # (Cin, R)
    slab = jnp.concatenate(pieces, axis=0)                  # (K, R), bf16, sublane concat

    # Single MXU contraction: (Cout_pad, K) x (K, R) -> (Cout_pad, R), f32 accumulation.
    y = jax.lax.dot_general(
        w_ref[...], slab,
        dimension_numbers=(((1,), (0,)), ((), ())),
        preferred_element_type=jnp.float32)

    y = y + shift_ref[...]                                  # folded bias + BatchNorm shift
    o_ref[0] = jnp.maximum(y, 0.0).astype(o_ref.dtype)      # ReLU, lane-dense bf16 store


def dilated_block(x_nchw, params, dilation_rates, *, tile_h=None,
                  compute_dtype=jnp.bfloat16, eps=1e-5):
    """DilatedBlock forward. x: (N, Cin, H, W) -> (N, layer_num*planes, H, W), f32."""
    N, Cin, H, W = map(int, x_nchw.shape)
    L = len(dilation_rates)
    planes = int(params[0]["w"].shape[-1])
    Cout = L * planes
    Cout_pad = _round_up(max(Cout, 8), 8)                   # dense sublanes in result tiles
    dmax = max(int(d) for d in dilation_rates)
    Hp, Wp = H + 2 * dmax, W + 2 * dmax
    Lflat = Hp * Wp + 2 * dmax                              # +/- dmax guard zeros
    K = L * 9 * Cin

    # Tile selection: biggest H-divisor whose extended-row count stays under the rows
    # target (VMEM-budget scale) while keeping the output block lane-dense; the whole
    # image (nh == 1) is always legal because full-dim blocks bypass the (8,128) rule.
    if tile_h is None:
        target_rows = 32768
        tile_h = H
        if H * Wp > target_rows:
            for t in range(H, 0, -1):
                if H % t == 0 and (t * Wp) % 128 == 0 and t * Wp <= target_rows:
                    tile_h = t
                    break
    assert H % tile_h == 0, (H, tile_h)
    nh = H // tile_h
    R = tile_h * Wp                                          # extended rows per grid step
    assert nh == 1 or R % 128 == 0, (tile_h, Wp)

    # --- host-side prep -------------------------------------------------------------
    # Pad once to max dilation, flatten padded spatial, add dmax guard zeros at both ends
    # so every tap slice is in-bounds, cast once to bf16.  Lane padding of this layout is
    # ~Lflat/roundup(Lflat,128), not the old ~Cin/128 blow-up.
    xf = x_nchw.astype(jnp.float32)
    xp = jnp.pad(xf, ((0, 0), (0, 0), (dmax, dmax), (dmax, dmax)))
    xflat = jnp.pad(xp.reshape(N, Cin, Hp * Wp), ((0, 0), (0, 0), (dmax, dmax)))
    xflat = xflat.astype(compute_dtype)                     # (N, Cin, Lflat)

    # Fuse all branch weights into one block-diagonal (Cout_pad, K) matrix with the BN
    # scale folded in (f32 fold, then a single bf16 cast); keep only the f32 shift.
    Wf = jnp.zeros((Cout_pad, K), jnp.float32)
    shift = jnp.zeros((Cout_pad, 1), jnp.float32)
    for b, p in enumerate(params):
        s = p["gamma"] / jnp.sqrt(p["var"] + eps)            # (planes,)
        wb = p["w"].reshape(9 * Cin, planes) * s[None, :]    # rows ordered (kh, kw, cin)
        Wf = Wf.at[b * planes:(b + 1) * planes,
                   b * 9 * Cin:(b + 1) * 9 * Cin].set(wb.T)
        shift = shift.at[b * planes:(b + 1) * planes, 0].set(
            (p["b"] - p["mean"]) * s + p["beta"])
    Wf = Wf.astype(compute_dtype)

    kernel = functools.partial(
        _fused_kernel, Wp=Wp, R=R, nh=nh, dmax=dmax,
        dilations=tuple(int(d) for d in dilation_rates))

    # Explicit scoped-VMEM limit derived from the actual per-step footprint.
    in_b = _round_up(Cin, 8) * _round_up(Lflat, 128) * 2
    out_b = Cout_pad * _round_up(R, 128) * 2
    slab_b = _round_up(K, 16) * _round_up(R, 128) * 2
    acc_b = Cout_pad * _round_up(R, 128) * 4
    need = 2 * (in_b + out_b) + slab_b + acc_b + (1 << 20)
    vmem_limit = int(min(64 << 20, max(32 << 20, 4 * need)))

    cost = pl.CostEstimate(
        flops=2 * N * nh * R * Cout_pad * K,
        transcendentals=0,
        bytes_accessed=int(xflat.size * 2 + Wf.size * 2 + shift.size * 4
                           + N * Cout_pad * nh * R * 2))

    out = pl.pallas_call(
        kernel,
        out_shape=jax.ShapeDtypeStruct((N, Cout_pad, nh * R), compute_dtype),
        grid=(N, nh),
        in_specs=[
            # Whole flat image of one batch element; block index independent of j so it is
            # not re-DMA'd across H-tiles of the same image (and j is "arbitrary" so
            # megacore never duplicates the read).
            pl.BlockSpec((1, Cin, Lflat), lambda n, j: (n, 0, 0)),
            pl.BlockSpec((Cout_pad, K), lambda n, j: (0, 0)),
            pl.BlockSpec((Cout_pad, 1), lambda n, j: (0, 0)),
        ],
        out_specs=pl.BlockSpec((1, Cout_pad, R), lambda n, j: (n, 0, j)),
        compiler_params=pltpu.CompilerParams(
            dimension_semantics=("parallel", "arbitrary"),
            vmem_limit_bytes=vmem_limit),
        cost_estimate=cost,
    )(xflat, Wf, shift)

    # One fused wrapper slice drops the channel padding and the 2*dmax garbage columns of
    # each extended row; cast back to f32 to match the module's output dtype.
    out = out.reshape(N, Cout_pad, H, Wp)[:, :Cout, :, dmax:dmax + W]
    return out.astype(jnp.float32)


def _make_params(key, inplanes, planes, layer_num):
    params = []
    for i in range(layer_num):
        k = jax.random.fold_in(key, i)
        kw_, kb_, kg_, kbe_, km_, kv_ = jax.random.split(k, 6)
        # Conv weight in (kh, kw, Cin, Cout) layout (== torch (Cout,Cin,3,3).transpose(2,3,1,0)).
        w = 0.1 * jax.random.normal(kw_, (3, 3, inplanes, planes), jnp.float32)
        b = 0.05 * jax.random.normal(kb_, (planes,), jnp.float32)
        gamma = 1.0 + 0.1 * jax.random.normal(kg_, (planes,), jnp.float32)
        beta = 0.1 * jax.random.normal(kbe_, (planes,), jnp.float32)
        mean = 0.1 * jax.random.normal(km_, (planes,), jnp.float32)
        var = 1.0 + 0.1 * jax.random.uniform(kv_, (planes,), jnp.float32)
        params.append(dict(w=w, b=b, gamma=gamma, beta=beta, mean=mean, var=var))
    return params


def _reference(x_nchw, params, dilation_rates, eps=1e-5):
    """Pure-JAX f32 reference (lax.conv_general_dilated) for correctness check."""
    outs = []
    for p, d in zip(params, dilation_rates):
        w_oihw = jnp.transpose(p["w"], (3, 2, 0, 1))
        y = jax.lax.conv_general_dilated(
            x_nchw, w_oihw, window_strides=(1, 1),
            padding=((d, d), (d, d)), rhs_dilation=(d, d),
            dimension_numbers=("NCHW", "OIHW", "NCHW"))
        y = y + p["b"][None, :, None, None]
        scale = p["gamma"] / jnp.sqrt(p["var"] + eps)
        y = (y - p["mean"][None, :, None, None]) * scale[None, :, None, None] \
            + p["beta"][None, :, None, None]
        outs.append(jnp.maximum(y, 0.0))
    return jnp.concatenate(outs, axis=1)


if __name__ == "__main__":
    # Small shapes consistent with the module: batch=2, inplanes=4, planes=4,
    # spatial 16x16, dilation_rates=[1,2,3] (layer_num=3).
    N, inplanes, planes, H, W = 2, 4, 4, 16, 16
    dilation_rates = (1, 2, 3)
    layer_num = len(dilation_rates)

    key = jax.random.PRNGKey(0)
    kx, kp = jax.random.split(key)
    x = jax.random.normal(kx, (N, inplanes, H, W), jnp.float32)   # NCHW like PyTorch
    params = _make_params(kp, inplanes, layer_num and planes, layer_num)

    # Auto tile selection -> one fat H-tile per image (grid=(2,1)): at this micro scale
    # fewer, larger grid steps win (0.35 us/step overhead dominates otherwise).
    out = dilated_block(x, params, dilation_rates)
    out = jax.block_until_ready(out)

    ref = jax.block_until_ready(_reference(x, params, dilation_rates))
    assert out.shape == (N, layer_num * planes, H, W), out.shape
    # bf16 operands/weights/output with f32 accumulation: tolerance reflects bf16 rounding.
    err = float(jnp.max(jnp.abs(out - ref)))
    assert err < 5e-2, err

    print("KERNEL_OK")
</pallas_src>

<mosaic_0001>
module attributes {stable_mosaic.version = 11 : i64} {
  func.func @_fused_kernel(%arg0: i32, %arg1: i32, %arg2: memref<1x4x490xbf16, #tpu.memory_space<vmem>>, %arg3: memref<16x108xbf16, #tpu.memory_space<vmem>>, %arg4: memref<16x1xf32, #tpu.memory_space<vmem>>, %arg5: memref<1x16x352xbf16, #tpu.memory_space<vmem>>) attributes {dimension_semantics = [#tpu.dimension_semantics<parallel>, #tpu.dimension_semantics<arbitrary>], iteration_bounds = array<i64: 2, 1>, scalar_prefetch = 0 : i64, scratch_operands = 0 : i64, tpu.core_type = #tpu.core_type<tc>, window_params = [{transform_indices = @transform_0, window_bounds = array<i64: 1, 4, 490>}, {pipeline_mode = #tpu.pipeline_mode<synchronous>, transform_indices = @transform_1, window_bounds = array<i64: 16, 108>}, {pipeline_mode = #tpu.pipeline_mode<synchronous>, transform_indices = @transform_2, window_bounds = array<i64: 16, 1>}, {transform_indices = @transform_3, window_bounds = array<i64: 1, 16, 352>}]} {
    %c0 = arith.constant 0 : index
    %c0_0 = arith.constant 0 : index
    %c46 = arith.constant 46 : index
    %0 = vector.load %arg2[%c0, %c0_0, %c46] : memref<1x4x490xbf16, #tpu.memory_space<vmem>>, vector<1x4x352xbf16>
    %1 = vector.shape_cast %0 : vector<1x4x352xbf16> to vector<4x352xbf16>
    %c0_1 = arith.constant 0 : index
    %c0_2 = arith.constant 0 : index
    %c47 = arith.constant 47 : index
    %2 = vector.load %arg2[%c0_1, %c0_2, %c47] : memref<1x4x490xbf16, #tpu.memory_space<vmem>>, vector<1x4x352xbf16>
    %3 = vector.shape_cast %2 : vector<1x4x352xbf16> to vector<4x352xbf16>
    %c0_3 = arith.constant 0 : index
    %c0_4 = arith.constant 0 : index
    %c48 = arith.constant 48 : index
    %4 = vector.load %arg2[%c0_3, %c0_4, %c48] : memref<1x4x490xbf16, #tpu.memory_space<vmem>>, vector<1x4x352xbf16>
    %5 = vector.shape_cast %4 : vector<1x4x352xbf16> to vector<4x352xbf16>
    %c0_5 = arith.constant 0 : index
    %c0_6 = arith.constant 0 : index
    %c68 = arith.constant 68 : index
    %6 = vector.load %arg2[%c0_5, %c0_6, %c68] : memref<1x4x490xbf16, #tpu.memory_space<vmem>>, vector<1x4x352xbf16>
    %7 = vector.shape_cast %6 : vector<1x4x352xbf16> to vector<4x352xbf16>
    %c0_7 = arith.constant 0 : index
    %c0_8 = arith.constant 0 : index
    %c69 = arith.constant 69 : index
    %8 = vector.load %arg2[%c0_7, %c0_8, %c69] : memref<1x4x490xbf16, #tpu.memory_space<vmem>>, vector<1x4x352xbf16>
    %9 = vector.shape_cast %8 : vector<1x4x352xbf16> to vector<4x352xbf16>
    %c0_9 = arith.constant 0 : index
    %c0_10 = arith.constant 0 : index
    %c70 = arith.constant 70 : index
    %10 = vector.load %arg2[%c0_9, %c0_10, %c70] : memref<1x4x490xbf16, #tpu.memory_space<vmem>>, vector<1x4x352xbf16>
    %11 = vector.shape_cast %10 : vector<1x4x352xbf16> to vector<4x352xbf16>
    %c0_11 = arith.constant 0 : index
    %c0_12 = arith.constant 0 : index
    %c90 = arith.constant 90 : index
    %12 = vector.load %arg2[%c0_11, %c0_12, %c90] : memref<1x4x490xbf16, #tpu.memory_space<vmem>>, vector<1x4x352xbf16>
    %13 = vector.shape_cast %12 : vector<1x4x352xbf16> to vector<4x352xbf16>
    %c0_13 = arith.constant 0 : index
    %c0_14 = arith.constant 0 : index
    %c91 = arith.constant 91 : index
    %14 = vector.load %arg2[%c0_13, %c0_14, %c91] : memref<1x4x490xbf16, #tpu.memory_space<vmem>>, vector<1x4x352xbf16>
    %15 = vector.shape_cast %14 : vector<1x4x352xbf16> to vector<4x352xbf16>
    %c0_15 = arith.constant 0 : index
    %c0_16 = arith.constant 0 : index
    %c92 = arith.constant 92 : index
    %16 = vector.load %arg2[%c0_15, %c0_16, %c92] : memref<1x4x490xbf16, #tpu.memory_space<vmem>>, vector<1x4x352xbf16>
    %17 = vector.shape_cast %16 : vector<1x4x352xbf16> to vector<4x352xbf16>
    %c0_17 = arith.constant 0 : index
    %c0_18 = arith.constant 0 : index
    %c23 = arith.constant 23 : index
    %18 = vector.load %arg2[%c0_17, %c0_18, %c23] : memref<1x4x490xbf16, #tpu.memory_space<vmem>>, vector<1x4x352xbf16>
    %19 = vector.shape_cast %18 : vector<1x4x352xbf16> to vector<4x352xbf16>
    %c0_19 = arith.constant 0 : index
    %c0_20 = arith.constant 0 : index
    %c25 = arith.constant 25 : index
    %20 = vector.load %arg2[%c0_19, %c0_20, %c25] : memref<1x4x490xbf16, #tpu.memory_space<vmem>>, vector<1x4x352xbf16>
    %21 = vector.shape_cast %20 : vector<1x4x352xbf16> to vector<4x352xbf16>
    %c0_21 = arith.constant 0 : index
    %c0_22 = arith.constant 0 : index
    %c27 = arith.constant 27 : index
    %22 = vector.load %arg2[%c0_21, %c0_22, %c27] : memref<1x4x490xbf16, #tpu.memory_space<vmem>>, vector<1x4x352xbf16>
    %23 = vector.shape_cast %22 : vector<1x4x352xbf16> to vector<4x352xbf16>
    %c0_23 = arith.constant 0 : index
    %c0_24 = arith.constant 0 : index
    %c67 = arith.constant 67 : index
    %24 = vector.load %arg2[%c0_23, %c0_24, %c67] : memref<1x4x490xbf16, #tpu.memory_space<vmem>>, vector<1x4x352xbf16>
    %25 = vector.shape_cast %24 : vector<1x4x352xbf16> to vector<4x352xbf16>
    %c0_25 = arith.constant 0 : index
    %c0_26 = arith.constant 0 : index
    %c69_27 = arith.constant 69 : index
    %26 = vector.load %arg2[%c0_25, %c0_26, %c69_27] : memref<1x4x490xbf16, #tpu.memory_space<vmem>>, vector<1x4x352xbf16>
    %27 = vector.shape_cast %26 : vector<1x4x352xbf16> to vector<4x352xbf16>
    %c0_28 = arith.constant 0 : index
    %c0_29 = arith.constant 0 : index
    %c71 = arith.constant 71 : index
    %28 = vector.load %arg2[%c0_28, %c0_29, %c71] : memref<1x4x490xbf16, #tpu.memory_space<vmem>>, vector<1x4x352xbf16>
    %29 = vector.shape_cast %28 : vector<1x4x352xbf16> to vector<4x352xbf16>
    %c0_30 = arith.constant 0 : index
    %c0_31 = arith.constant 0 : index
    %c111 = arith.constant 111 : index
    %30 = vector.load %arg2[%c0_30, %c0_31, %c111] : memref<1x4x490xbf16, #tpu.memory_space<vmem>>, vector<1x4x352xbf16>
    %31 = vector.shape_cast %30 : vector<1x4x352xbf16> to vector<4x352xbf16>
    %c0_32 = arith.constant 0 : index
    %c0_33 = arith.constant 0 : index
    %c113 = arith.constant 113 : index
    %32 = vector.load %arg2[%c0_32, %c0_33, %c113] : memref<1x4x490xbf16, #tpu.memory_space<vmem>>, vector<1x4x352xbf16>
    %33 = vector.shape_cast %32 : vector<1x4x352xbf16> to vector<4x352xbf16>
    %c0_34 = arith.constant 0 : index
    %c0_35 = arith.constant 0 : index
    %c115 = arith.constant 115 : index
    %34 = vector.load %arg2[%c0_34, %c0_35, %c115] : memref<1x4x490xbf16, #tpu.memory_space<vmem>>, vector<1x4x352xbf16>
    %35 = vector.shape_cast %34 : vector<1x4x352xbf16> to vector<4x352xbf16>
    %c0_36 = arith.constant 0 : index
    %c0_37 = arith.constant 0 : index
    %c0_38 = arith.constant 0 : index
    %36 = vector.load %arg2[%c0_36, %c0_37, %c0_38] : memref<1x4x490xbf16, #tpu.memory_space<vmem>>, vector<1x4x352xbf16>
    %37 = vector.shape_cast %36 : vector<1x4x352xbf16> to vector<4x352xbf16>
    %c0_39 = arith.constant 0 : index
    %c0_40 = arith.constant 0 : index
    %c3 = arith.constant 3 : index
    %38 = vector.load %arg2[%c0_39, %c0_40, %c3] : memref<1x4x490xbf16, #tpu.memory_space<vmem>>, vector<1x4x352xbf16>
    %39 = vector.shape_cast %38 : vector<1x4x352xbf16> to vector<4x352xbf16>
    %c0_41 = arith.constant 0 : index
    %c0_42 = arith.constant 0 : index
    %c6 = arith.constant 6 : index
    %40 = vector.load %arg2[%c0_41, %c0_42, %c6] : memref<1x4x490xbf16, #tpu.memory_space<vmem>>, vector<1x4x352xbf16>
    %41 = vector.shape_cast %40 : vector<1x4x352xbf16> to vector<4x352xbf16>
    %c0_43 = arith.constant 0 : index
    %c0_44 = arith.constant 0 : index
    %c66 = arith.constant 66 : index
    %42 = vector.load %arg2[%c0_43, %c0_44, %c66] : memref<1x4x490xbf16, #tpu.memory_space<vmem>>, vector<1x4x352xbf16>
    %43 = vector.shape_cast %42 : vector<1x4x352xbf16> to vector<4x352xbf16>
    %c0_45 = arith.constant 0 : index
    %c0_46 = arith.constant 0 : index
    %c69_47 = arith.constant 69 : index
    %44 = vector.load %arg2[%c0_45, %c0_46, %c69_47] : memref<1x4x490xbf16, #tpu.memory_space<vmem>>, vector<1x4x352xbf16>
    %45 = vector.shape_cast %44 : vector<1x4x352xbf16> to vector<4x352xbf16>
    %c0_48 = arith.constant 0 : index
    %c0_49 = arith.constant 0 : index
    %c72 = arith.constant 72 : index
    %46 = vector.load %arg2[%c0_48, %c0_49, %c72] : memref<1x4x490xbf16, #tpu.memory_space<vmem>>, vector<1x4x352xbf16>
    %47 = vector.shape_cast %46 : vector<1x4x352xbf16> to vector<4x352xbf16>
    %c0_50 = arith.constant 0 : index
    %c0_51 = arith.constant 0 : index
    %c132 = arith.constant 132 : index
    %48 = vector.load %arg2[%c0_50, %c0_51, %c132] : memref<1x4x490xbf16, #tpu.memory_space<vmem>>, vector<1x4x352xbf16>
    %49 = vector.shape_cast %48 : vector<1x4x352xbf16> to vector<4x352xbf16>
    %c0_52 = arith.constant 0 : index
    %c0_53 = arith.constant 0 : index
    %c135 = arith.constant 135 : index
    %50 = vector.load %arg2[%c0_52, %c0_53, %c135] : memref<1x4x490xbf16, #tpu.memory_space<vmem>>, vector<1x4x352xbf16>
    %51 = vector.shape_cast %50 : vector<1x4x352xbf16> to vector<4x352xbf16>
    %c0_54 = arith.constant 0 : index
    %c0_55 = arith.constant 0 : index
    %c138 = arith.constant 138 : index
    %52 = vector.load %arg2[%c0_54, %c0_55, %c138] : memref<1x4x490xbf16, #tpu.memory_space<vmem>>, vector<1x4x352xbf16>
    %53 = vector.shape_cast %52 : vector<1x4x352xbf16> to vector<4x352xbf16>
    %54 = tpu.concatenate %1, %3, %5, %7, %9, %11, %13, %15, %17, %19, %21, %23, %25, %27, %29, %31 in 0 : vector<4x352xbf16>, vector<4x352xbf16>, vector<4x352xbf16>, vector<4x352xbf16>, vector<4x352xbf16>, vector<4x352xbf16>, vector<4x352xbf16>, vector<4x352xbf16>, vector<4x352xbf16>, vector<4x352xbf16>, vector<4x352xbf16>, vector<4x352xbf16>, vector<4x352xbf16>, vector<4x352xbf16>, vector<4x352xbf16>, vector<4x352xbf16> -> vector<64x352xbf16>
    %55 = tpu.concatenate %33, %35, %37, %39, %41, %43, %45, %47, %49, %51, %53 in 0 : vector<4x352xbf16>, vector<4x352xbf16>, vector<4x352xbf16>, vector<4x352xbf16>, vector<4x352xbf16>, vector<4x352xbf16>, vector<4x352xbf16>, vector<4x352xbf16>, vector<4x352xbf16>, vector<4x352xbf16>, vector<4x352xbf16> -> vector<44x352xbf16>
    %56 = tpu.concatenate %54, %55 in 0 : vector<64x352xbf16>, vector<44x352xbf16> -> vector<108x352xbf16>
    %c0_56 = arith.constant 0 : index
    %c0_57 = arith.constant 0 : index
    %57 = vector.load %arg3[%c0_56, %c0_57] : memref<16x108xbf16, #tpu.memory_space<vmem>>, vector<16x108xbf16>
    %cst = arith.constant dense<0.000000e+00> : vector<16x352xf32>
    %58 = tpu.matmul %57, %56, %cst {dimension_numbers = #tpu.dot_dimension_numbers<[1], [0], [0], [1], [0, 0, 1, 1], [], []>} : vector<16x108xbf16>, vector<108x352xbf16>, vector<16x352xf32> -> vector<16x352xf32>
    %c0_58 = arith.constant 0 : index
    %c0_59 = arith.constant 0 : index
    %59 = vector.load %arg4[%c0_58, %c0_59] : memref<16x1xf32, #tpu.memory_space<vmem>>, vector<16x1xf32>
    %60 = vector.broadcast %59 : vector<16x1xf32> to vector<16x352xf32>
    %61 = arith.addf %58, %60 : vector<16x352xf32>
    %cst_60 = arith.constant 0.000000e+00 : f32
    %62 = vector.broadcast %cst_60 : f32 to vector<16x352xf32>
    %63 = arith.maximumf %61, %62 : vector<16x352xf32>
    %64 = arith.truncf %63 : vector<16x352xf32> to vector<16x352xbf16>
    %c0_61 = arith.constant 0 : index
    %c0_62 = arith.constant 0 : index
    %c0_63 = arith.constant 0 : index
    %65 = vector.load %arg5[%c0_61, %c0_62, %c0_63] : memref<1x16x352xbf16, #tpu.memory_space<vmem>>, vector<1x16x352xbf16>
    %66 = vector.shape_cast %65 : vector<1x16x352xbf16> to vector<16x352xbf16>
    %67 = vector.shape_cast %64 : vector<16x352xbf16> to vector<1x16x352xbf16>
    tpu.vector_store %arg5[%c0_61, %c0_62, %c0_63], %67 {strides = array<i32>} : memref<1x16x352xbf16, #tpu.memory_space<vmem>>, vector<1x16x352xbf16>,
    return
  }
  func.func @transform_0(%arg0: i32, %arg1: i32) -> (i32, i32, i32) {
    %c0_i32 = arith.constant 0 : i32
    %c0_i32_0 = arith.constant 0 : i32
    %c0_i32_1 = arith.constant 0 : i32
    return %arg0, %c0_i32, %c0_i32_0 : i32, i32, i32
  }
  func.func @transform_1(%arg0: i32, %arg1: i32) -> (i32, i32) {
    %c0_i32 = arith.constant 0 : i32
    %c0_i32_0 = arith.constant 0 : i32
    %c0_i32_1 = arith.constant 0 : i32
    return %c0_i32, %c0_i32_0 : i32, i32
  }
  func.func @transform_2(%arg0: i32, %arg1: i32) -> (i32, i32) {
    %c0_i32 = arith.constant 0 : i32
    %c0_i32_0 = arith.constant 0 : i32
    %c0_i32_1 = arith.constant 0 : i32
    return %c0_i32, %c0_i32_0 : i32, i32
  }
  func.func @transform_3(%arg0: i32, %arg1: i32) -> (i32, i32, i32) {
    %c0_i32 = arith.constant 0 : i32
    %c0_i32_0 = arith.constant 0 : i32
    return %arg0, %c0_i32, %arg1 : i32, i32, i32
  }
}

</mosaic_0001>

<llo_original>
// kernel: tpu_custom_call.1
$region0: #{tpu_custom_call.1}
  #allocation0 [shape = 'u32[]', space=smem, size = 0x4, offset = 0x4, fixed_abs, tag = 'smem constant byte address 0x4 - core index']
  #allocation1 [shape = 'u32[144,128]{1,0:T(1,128)}', space=vmem, size = 0x12000, scoped, tag = 'internal scratch']
  %s0 = inlined_call_operand.vmem [shape: bf16[2,4,490], index: 0, kind: input, shape index: {}]
  %s1 = inlined_call_operand.hbm [shape: bf16[16,108], index: 1, kind: input, shape index: {}]
  %s2 = inlined_call_operand.vmem [shape: f32[16,1], index: 2, kind: input, shape index: {}]
  %s3 = inlined_call_operand.hbm [shape: bf16[2,16,352], index: 3, kind: output, shape index: {}]
  %s4 = sld [smem:[#allocation0]]
  $region49: #{tpu_custom_call.1} parent=0
    _
  %s6 = ssub.s32 1, %s4
  %s7 = scalar_select 0, %s6, %s4
  $region1: #{tpu_custom_call.1} parent=0
    #allocation2 [shape = 'u8[4096]{0}', space=vmem, size = 0x1000, scoped, tag = 'input window, operand 1, single buffered']
    #allocation3 [shape = 's32[2]{0}', space=sflag, size = 0x8, scoped, tag = 'scoped memory for tpu_custom_call.1']
    #allocation4 [shape = 's32[2]{0}', space=sflag, size = 0x8, scoped, tag = 'scoped memory for tpu_custom_call.1']
    #allocation5 [shape = 'u8[24576]{0}', space=vmem, size = 0x6000, scoped, tag = 'output window, operand 0']
    %8 = vsyncpa [#allocation3], 0
    %9 = vsyncpa [#allocation4], 0
    %s10 = scalar_lea.sflag [#allocation4], 1
    %11 = vsyncpa %s10, 0
    loop: start=0, step=1, limit=4
    $region2: #{tpu_custom_call.1} parent=1 // loop_pre_header
      _
    $region3: #{tpu_custom_call.1} parent=1 // loop_header
      %s13 = sphi 0, %s17
      %p14 = scmp.ge.s32.totalorder %s13, 4
      %s20 = sphi 0, %s32
      %s21 = sphi 0, %s28
      %s22 = sphi 0, %s20
      %s23 = sphi 0, %s21
      %s24 = sphi 0, %s22
      %s25 = sphi 0, %s23
      %s35 = sphi 0, %s37
      %s38 = sphi 0, %s35
      %s39 = sphi 0, %s38
      %s55 = sphi 0, %s39
      %s59 = sphi 0, %s59
      %s61 = sphi 0, %s59
      %s62 = sphi 0, %s61
      %s76 = sphi 0, %s62
      %s80 = sphi 0, %s80
      %s82 = sphi 0, %s80
      %s83 = sphi 0, %s82
      %s97 = sphi 0, %s83
      %s105 = sphi 0, %s107
      %s108 = sphi 0, %s105
      %s109 = sphi 0, %s108
      %s125 = sphi 0, %s109
    $region4: #{tpu_custom_call.1} parent=1 // loop_header_branch
      %16 = sbr.rel (%p14) target = $region8
    $region5: #{tpu_custom_call.1} parent=1 // loop_body
      %s18 = ssub.s32 %s13, 1
      %s19 = ssub.s32 %s13, 2
      %s26 = sadd.s32 1, %s21
      %p27 = scmp.ge.s32.totalorder %s26, 1
      %s28 = scalar_select %p27, 0, %s26
      %s29 = sadd.s32 1, %s20
      %s30 = scalar_select %p27, %s29, %s20
      %p31 = scmp.ge.s32.totalorder %s30, 2
      %s32 = scalar_select %p31, 0, %s30
      %s33 = ssub.s32 %s20, %s32
      %p34 = scmp.eq.s32.totalorder %s33, 0
      %s36 = sadd.s32 %s35, 1
      %s37 = scalar_select %p34, %s35, %s36
      %p40 = pneg %p34
      %p41 = scmp.eq.s32.totalorder %s13, 1
      %p42 = por %p40, %p41
      %p43 = scmp.ne.s32.totalorder %s35, %s38
      %p44 = scmp.eq.s32.totalorder %s13, 0
      %p45 = por %p43, %p44
      %p46 = scmp.ne.s32.totalorder %s35, %s38
      %p47 = scmp.eq.s32.totalorder %s18, 1
      %p48 = por %p46, %p47
      %p49 = scmp.ne.s32.totalorder %s38, %s39
      %p50 = scmp.eq.s32.totalorder %s18, 0
      %p51 = por %p49, %p50
      %p52 = scmp.ne.s32.totalorder %s38, %s39
      %p53 = scmp.eq.s32.totalorder %s19, 1
      %p54 = por %p52, %p53
      %p56 = scmp.ne.s32.totalorder %s39, %s55
      %p57 = scmp.eq.s32.totalorder %s19, 0
      %p58 = por %p56, %p57
      %s60 = sadd.s32 %s59, 1
      %p63 = scmp.eq.s32.totalorder %s13, 1
      %p64 = scmp.ne.s32.totalorder %s59, %s61
      %p65 = scmp.eq.s32.totalorder %s13, 0
      %p66 = por %p64, %p65
      %p67 = scmp.ne.s32.totalorder %s59, %s61
      %p68 = scmp.eq.s32.totalorder %s18, 1
      %p69 = por %p67, %p68
      %p70 = scmp.ne.s32.totalorder %s61, %s62
      %p71 = scmp.eq.s32.totalorder %s18, 0
      %p72 = por %p70, %p71
      %p73 = scmp.ne.s32.totalorder %s61, %s62
      %p74 = scmp.eq.s32.totalorder %s19, 1
      %p75 = por %p73, %p74
      %p77 = scmp.ne.s32.totalorder %s62, %s76
      %p78 = scmp.eq.s32.totalorder %s19, 0
      %p79 = por %p77, %p78
      %s81 = sadd.s32 %s80, 1
      %p84 = scmp.eq.s32.totalorder %s13, 1
      %p85 = scmp.ne.s32.totalorder %s80, %s82
      %p86 = scmp.eq.s32.totalorder %s13, 0
      %p87 = por %p85, %p86
      %p88 = scmp.ne.s32.totalorder %s80, %s82
      %p89 = scmp.eq.s32.totalorder %s18, 1
      %p90 = por %p88, %p89
      %p91 = scmp.ne.s32.totalorder %s82, %s83
      %p92 = scmp.eq.s32.totalorder %s18, 0
      %p93 = por %p91, %p92
      %p94 = scmp.ne.s32.totalorder %s82, %s83
      %p95 = scmp.eq.s32.totalorder %s19, 1
      %p96 = por %p94, %p95
      %p98 = scmp.ne.s32.totalorder %s83, %s97
      %p99 = scmp.eq.s32.totalorder %s19, 0
      %p100 = por %p98, %p99
      %s101 = ssub.s32 %s20, %s32
      %s102 = ssub.s32 %s21, %s28
      %s103 = sor.u32 %s101, %s102
      %p104 = scmp.eq.s32.totalorder %s103, 0
      %s106 = sadd.s32 %s105, 1
      %s107 = scalar_select %p104, %s105, %s106
      %p110 = pneg %p104
      %p111 = scmp.eq.s32.totalorder %s13, 1
      %p112 = por %p110, %p111
      %p113 = scmp.ne.s32.totalorder %s105, %s108
      %p114 = scmp.eq.s32.totalorder %s13, 0
      %p115 = por %p113, %p114
      %p116 = scmp.ne.s32.totalorder %s105, %s108
      %p117 = scmp.eq.s32.totalorder %s18, 1
      %p118 = por %p116, %p117
      %p119 = scmp.ne.s32.totalorder %s108, %s109
      %p120 = scmp.eq.s32.totalorder %s18, 0
      %p121 = por %p119, %p120
      %p122 = scmp.ne.s32.totalorder %s108, %s109
      %p123 = scmp.eq.s32.totalorder %s19, 1
      %p124 = por %p122, %p123
      %p126 = scmp.ne.s32.totalorder %s109, %s125
      %p127 = scmp.eq.s32.totalorder %s19, 0
      %p128 = por %p126, %p127
      %p129 = scmp.le.s32.totalorder 1, %s13
      %p130 = scmp.lt.s32.totalorder %s13, 3
      %p131 = pnand %p129, %p130
      %p132 = pneg %p131
      // Predicated region
      $region9: #{tpu_custom_call.1} parent=5 // pred_check
        _
      $region10: #{tpu_custom_call.1} parent=5 // pred_check_branch
        %134 = sbr.rel (%p131) target = $region12
      $region11: #{tpu_custom_call.1} parent=5 // pred_region
        %s135 = ssub.s32 %s13, 1
        // Predicated region
        $region13: #{tpu_custom_call.1} parent=11 // pred_check
          %p136 = pneg %p72
        $region14: #{tpu_custom_call.1} parent=11 // pred_check_branch
          %138 = sbr.rel (%p136) target = $region16
        $region15: #{tpu_custom_call.1} parent=11 // pred_region
          %s140 = ssub.s32 128, 128
          %141 = vsyncadd [#allocation3], %s140
          %s142 = sshll.u32 [#allocation2], 4
          %s143 = int_to_ptr.vmem [resolvable:$true] %s142
          %148 = dma.hbm_to_vmem [thread:$0]  %s1, 128, %s143, [#allocation3], 64, 64, 4
        $region16: #{tpu_custom_call.1} parent=11 // pred_fallthru
          _
        // Predicated region
        $region17: #{tpu_custom_call.1} parent=11 // pred_check
          %p149 = pneg %p93
        $region18: #{tpu_custom_call.1} parent=11 // pred_check_branch
          %151 = sbr.rel (%p149) target = $region20
        $region19: #{tpu_custom_call.1} parent=11 // pred_region
          _
        $region20: #{tpu_custom_call.1} parent=11 // pred_fallthru
          _
      $region12: #{tpu_custom_call.1} parent=5 // pred_fallthru
        _
      %p152 = scmp.lt.s32.totalorder %s13, 2
      // Predicated region
      $region21: #{tpu_custom_call.1} parent=5 // pred_check
        %p153 = pneg %p152
      $region22: #{tpu_custom_call.1} parent=5 // pred_check_branch
        %155 = sbr.rel (%p153) target = $region24
      $region23: #{tpu_custom_call.1} parent=5 // pred_region
        // Predicated region
        $region25: #{tpu_custom_call.1} parent=23 // pred_check
          %p156 = pneg %p45
        $region26: #{tpu_custom_call.1} parent=23 // pred_check_branch
          %158 = sbr.rel (%p156) target = $region28
        $region27: #{tpu_custom_call.1} parent=23 // pred_region
          %p159 = scmp.lt.s32.totalorder %s20, 1
          %s160 = scalar_select %p159, %s20, 1
          %s161 = smul.addr %s160, 4
          %s162 = smul.addr %s161, 2
          %s163 = scalar_lea.vmem %s0, %s162
        $region28: #{tpu_custom_call.1} parent=23 // pred_fallthru
          _
      $region24: #{tpu_custom_call.1} parent=5 // pred_fallthru
        _
      %p164 = scmp.le.s32.totalorder 1, %s13
      %p165 = scmp.lt.s32.totalorder %s13, 3
      %p166 = pnand %p164, %p165
      %p167 = pneg %p166
      // Predicated region
      $region29: #{tpu_custom_call.1} parent=5 // pred_check
        _
      $region30: #{tpu_custom_call.1} parent=5 // pred_check_branch
        %169 = sbr.rel (%p166) target = $region32
      $region31: #{tpu_custom_call.1} parent=5 // pred_region
        %s170 = ssub.s32 %s13, 1
        // Predicated region
        $region33: #{tpu_custom_call.1} parent=31 // pred_check
          %p171 = pneg %p72
        $region34: #{tpu_custom_call.1} parent=31 // pred_check_branch
          %173 = sbr.rel (%p171) target = $region36
        $region35: #{tpu_custom_call.1} parent=31 // pred_region
          %174 = dma.done [#allocation3], 128
        $region36: #{tpu_custom_call.1} parent=31 // pred_fallthru
          _
        %p175 = scmp.lt.s32.totalorder %s22, 1
        %s176 = scalar_select %p175, %s22, 1
        %s177 = smul.addr %s176, 4
        %s178 = smul.addr %s177, 2
        %s179 = scalar_lea.vmem %s0, %s178
        %p180 = pneg %p51
        %p181 = pneg %p48
        %p182 = pneg %p72
        %p183 = pneg %p69
        %p184 = pneg %p93
        %p185 = pneg %p90
        %p186 = pneg %p121
        %p187 = pneg %p118
        %s188 = sand.u32 %s108, 1
        %s189 = scalar_lea.sflag [#allocation4], %s188
        %s190 = sand.u32 %s108, 1
        %s191 = smul.addr %s190, 24
        %s192 = scalar_lea.vmem [#allocation5], %s191
        %p193 = scmp.lt.s32.totalorder %s22, 1
        %s194 = scalar_select %p193, %s22, 1
        %s195 = smul.addr %s194, 4
        %s196 = smul.addr %s195, 2
        %s197 = scalar_lea.vmem %s0, %s196
        %s198 = smul.u32 3, %s23
        %v200 = vld [vmem:[%s197] sm:$0xff]
        %v201 = vld [vmem:[%s197] sm:$0x3f]
        %v202 = vld [vmem:[%s197 + $0x2] sm:$0x3f]
        %v204 = vcombine.high %v200, %v200
        %v206 = vunpack.c.l.s4 1983009808
        %v207 = vunpack.c.0.s8 %v206
        %v208 = vlaneseq
        %v209 = vshrl.u32 %v208, 7
        %v210 = vsub.s32 %v207, %v209
        %v211 = vrot.slane %v200, %v210
        %v213 = vunpack.c.l.s4 1983009808
        %v214 = vunpack.c.0.s8 %v213
        %v215 = vlaneseq
        %v216 = vshrl.u32 %v215, 7
        %v217 = vsub.s32 %v214, %v216
        %v218 = vrot.slane %v204, %v217
        %v219 = vcombine.high %v211, %v211
        %v220 = vcombine.high %v218, %v218
        %v221 = vcombine.low %v200, %v200
        %v223 = vunpack.c.l.s4 1983009808
        %v224 = vunpack.c.0.s8 %v223
        %v225 = vlaneseq
        %v226 = vshrl.u32 %v225, 7
        %v227 = vsub.s32 %v224, %v226
        %v228 = vrot.slane %v221, %v227
        %v229 = vcombine.high %v228, %v228
        %230 = vrot.lane.b32.xlu0 %v228, 127
        %v231 = vpop.permute.xlu0 %230
        %232 = vrot.lane.b32.xlu0 %v229, 127
        %v233 = vpop.permute.xlu0 %232
        %234 = vrot.lane.b32.xlu0 %v211, 127
        %v235 = vpop.permute.xlu0 %234
        %236 = vrot.lane.b32.xlu0 %v219, 127
        %v237 = vpop.permute.xlu0 %236
        %vm238 = vcmask 1039360
        %v239 = vsel %vm238, %v231, %v233
        %v240 = vsel %vm238, %v233, %v235
        %v241 = vsel %vm238, %v235, %v237
        %v242 = vcombine.low %v211, %v211
        %v243 = vcombine.low %v218, %v218
        %244 = vrot.lane.b32.xlu0 %v242, 126
        %v245 = vpop.permute.xlu0 %244
        %246 = vrot.lane.b32.xlu0 %v211, 126
        %v247 = vpop.permute.xlu0 %246
        %248 = vrot.lane.b32.xlu0 %v243, 126
        %v249 = vpop.permute.xlu0 %248
        %250 = vrot.lane.b32.xlu0 %v218, 126
        %v251 = vpop.permute.xlu0 %250
        %vm252 = vcmask 1031168
        %v253 = vsel %vm252, %v245, %v247
        %v254 = vsel %vm252, %v247, %v249
        %v255 = vsel %vm252, %v249, %v251
        %v256 = vcombine.low %v228, %v228
        %257 = vrot.lane.b32.xlu0 %v256, 106
        %v258 = vpop.permute.xlu0 %257
        %259 = vrot.lane.b32.xlu0 %v228, 106
        %v260 = vpop.permute.xlu0 %259
        %261 = vrot.lane.b32.xlu0 %v242, 106
        %v262 = vpop.permute.xlu0 %261
        %263 = vrot.lane.b32.xlu0 %v211, 106
        %v264 = vpop.permute.xlu0 %263
        %vm265 = vcmask 867328
        %v266 = vsel %vm265, %v258, %v260
        %v267 = vsel %vm265, %v260, %v262
        %v268 = vsel %vm265, %v262, %v264
        %269 = vrot.lane.b32.xlu0 %v211, 105
        %v270 = vpop.permute.xlu0 %269
        %271 = vrot.lane.b32.xlu0 %v219, 105
        %v272 = vpop.permute.xlu0 %271
        %273 = vrot.lane.b32.xlu0 %v218, 105
        %v274 = vpop.permute.xlu0 %273
        %275 = vrot.lane.b32.xlu0 %v220, 105
        %v276 = vpop.permute.xlu0 %275
        %vm277 = vcmask 859136
        %v278 = vsel %vm277, %v270, %v272
        %v279 = vsel %vm277, %v272, %v274
        %v280 = vsel %vm277, %v274, %v276
        %281 = vrot.lane.b32.xlu0 %v228, 104
        %v282 = vpop.permute.xlu0 %281
        %283 = vrot.lane.b32.xlu0 %v229, 104
        %v284 = vpop.permute.xlu0 %283
        %285 = vrot.lane.b32.xlu0 %v211, 104
        %v286 = vpop.permute.xlu0 %285
        %287 = vrot.lane.b32.xlu0 %v219, 104
        %v288 = vpop.permute.xlu0 %287
        %vm289 = vcmask 850944
        %v290 = vsel %vm289, %v282, %v284
        %v291 = vsel %vm289, %v284, %v286
        %v292 = vsel %vm289, %v286, %v288
        %293 = vrot.lane.b32.xlu0 %v242, 84
        %v294 = vpop.permute.xlu0 %293
        %295 = vrot.lane.b32.xlu0 %v211, 84
        %v296 = vpop.permute.xlu0 %295
        %297 = vrot.lane.b32.xlu0 %v243, 84
        %v298 = vpop.permute.xlu0 %297
        %299 = vrot.lane.b32.xlu0 %v218, 84
        %v300 = vpop.permute.xlu0 %299
        %vm301 = vcmask 687104
        %v302 = vsel %vm301, %v294, %v296
        %v303 = vsel %vm301, %v296, %v298
        %v304 = vsel %vm301, %v298, %v300
        %305 = vrot.lane.b32.xlu0 %v256, 83
        %v306 = vpop.permute.xlu0 %305
        %307 = vrot.lane.b32.xlu0 %v228, 83
        %v308 = vpop.permute.xlu0 %307
        %309 = vrot.lane.b32.xlu0 %v242, 83
        %v310 = vpop.permute.xlu0 %309
        %311 = vrot.lane.b32.xlu0 %v211, 83
        %v312 = vpop.permute.xlu0 %311
        %vm313 = vcmask 678912
        %v314 = vsel %vm313, %v306, %v308
        %v315 = vsel %vm313, %v308, %v310
        %v316 = vsel %vm313, %v310, %v312
        %317 = vrot.lane.b32.xlu0 %v211, 82
        %v318 = vpop.permute.xlu0 %317
        %319 = vrot.lane.b32.xlu0 %v219, 82
        %v320 = vpop.permute.xlu0 %319
        %321 = vrot.lane.b32.xlu0 %v218, 82
        %v322 = vpop.permute.xlu0 %321
        %323 = vrot.lane.b32.xlu0 %v220, 82
        %v324 = vpop.permute.xlu0 %323
        %vm325 = vcmask 670720
        %v326 = vsel %vm325, %v318, %v320
        %v327 = vsel %vm325, %v320, %v322
        %v328 = vsel %vm325, %v322, %v324
        %v330 = vcombine.low %v201, %v201
        %v332 = vunpack.c.l.s4 1983009808
        %v333 = vunpack.c.0.s8 %v332
        %v334 = vlaneseq
        %v335 = vshrl.u32 %v334, 7
        %v336 = vsub.s32 %v333, %v335
        %v337 = vrot.slane %v330, %v336
        %v339 = vunpack.c.l.s4 1983009808
        %v340 = vunpack.c.0.s8 %v339
        %v341 = vlaneseq
        %v342 = vshrl.u32 %v341, 7
        %v343 = vsub.s32 %v340, %v342
        %v344 = vrot.slane %v201, %v343
        %v345 = vcombine.high %v337, %v337
        %346 = vrot.lane.b32.xlu0 %v337, 23
        %v347 = vpop.permute.xlu0 %346
        %348 = vrot.lane.b32.xlu0 %v345, 23
        %v349 = vpop.permute.xlu0 %348
        %350 = vrot.lane.b32.xlu0 %v344, 23
        %v351 = vpop.permute.xlu0 %350
        %vm352 = vcmask 187392
        %v353 = vsel %vm352, %v347, %v349
        %v354 = vsel %vm352, %v349, %v351
        %v355 = vcombine.high %v201, %v201
        %v357 = vunpack.c.l.s4 1983009808
        %v358 = vunpack.c.0.s8 %v357
        %v359 = vlaneseq
        %v360 = vshrl.u32 %v359, 7
        %v361 = vsub.s32 %v358, %v360
        %v362 = vrot.slane %v355, %v361
        %v363 = vcombine.low %v344, %v344
        %v364 = vcombine.low %v362, %v362
        %365 = vrot.lane.b32.xlu0 %v363, 21
        %v366 = vpop.permute.xlu0 %365
        %367 = vrot.lane.b32.xlu0 %v344, 21
        %v368 = vpop.permute.xlu0 %367
        %369 = vrot.lane.b32.xlu0 %v364, 21
        %v370 = vpop.permute.xlu0 %369
        %vm371 = vcmask 171008
        %v372 = vsel %vm371, %v366, %v368
        %v373 = vsel %vm371, %v368, %v370
        %v374 = vcombine.low %v337, %v337
        %375 = vrot.lane.b32.xlu0 %v374, 19
        %v376 = vpop.permute.xlu0 %375
        %377 = vrot.lane.b32.xlu0 %v337, 19
        %v378 = vpop.permute.xlu0 %377
        %379 = vrot.lane.b32.xlu0 %v363, 19
        %v380 = vpop.permute.xlu0 %379
        %vm381 = vcmask 154624
        %v382 = vsel %vm381, %v376, %v378
        %v383 = vsel %vm381, %v378, %v380
        %384 = vrot.lane.b32.xlu0 %v211, 107
        %v385 = vpop.permute.xlu0 %384
        %386 = vrot.lane.b32.xlu0 %v219, 107
        %v387 = vpop.permute.xlu0 %386
        %388 = vrot.lane.b32.xlu0 %v218, 107
        %v389 = vpop.permute.xlu0 %388
        %390 = vrot.lane.b32.xlu0 %v220, 107
        %v391 = vpop.permute.xlu0 %390
        %vm392 = vcmask 875520
        %v393 = vsel %vm392, %v385, %v387
        %v394 = vsel %vm392, %v387, %v389
        %v395 = vsel %vm392, %v389, %v391
        %396 = vrot.lane.b32.xlu0 %v228, 105
        %v397 = vpop.permute.xlu0 %396
        %398 = vrot.lane.b32.xlu0 %v229, 105
        %v399 = vpop.permute.xlu0 %398
        %v400 = vsel %vm277, %v397, %v399
        %v401 = vsel %vm277, %v399, %v270
        %402 = vrot.lane.b32.xlu0 %v242, 103
        %v403 = vpop.permute.xlu0 %402
        %404 = vrot.lane.b32.xlu0 %v211, 103
        %v405 = vpop.permute.xlu0 %404
        %406 = vrot.lane.b32.xlu0 %v243, 103
        %v407 = vpop.permute.xlu0 %406
        %408 = vrot.lane.b32.xlu0 %v218, 103
        %v409 = vpop.permute.xlu0 %408
        %vm410 = vcmask 842752
        %v411 = vsel %vm410, %v403, %v405
        %v412 = vsel %vm410, %v405, %v407
        %v413 = vsel %vm410, %v407, %v409
        %414 = vrot.lane.b32.xlu0 %v256, 63
        %v415 = vpop.permute.xlu0 %414
        %416 = vrot.lane.b32.xlu0 %v228, 63
        %v417 = vpop.permute.xlu0 %416
        %418 = vrot.lane.b32.xlu0 %v242, 63
        %v419 = vpop.permute.xlu0 %418
        %420 = vrot.lane.b32.xlu0 %v211, 63
        %v421 = vpop.permute.xlu0 %420
        %vm422 = vcmask 515072
        %v423 = vsel %vm422, %v415, %v417
        %v424 = vsel %vm422, %v417, %v419
        %v425 = vsel %vm422, %v419, %v421
        %vm426 = vcmask 1041408
        %v429 = vsel %vm426, %v211, %v239
        %v432 = vsel %vm426, %v219, %v240
        %v435 = vsel %vm426, %v218, %v241
        %v438 = vsel %vm426, %v220, %v237
        %vm439 = vcmask 1043456
        %v441 = vsel %vm439, %v429, %v253
        %v443 = vsel %vm439, %v432, %v254
        %v445 = vsel %vm439, %v435, %v255
        %v447 = vsel %vm439, %v438, %v251
        %vm448 = vcmask 1045504
        %v450 = vsel %vm448, %v441, %v266
        %v452 = vsel %vm448, %v443, %v267
        %v454 = vsel %vm448, %v445, %v268
        %v456 = vsel %vm448, %v447, %v264
        %v459 = vsel %vm426, %v278, %v290
        %v462 = vsel %vm426, %v279, %v291
        %v465 = vsel %vm426, %v280, %v292
        %v468 = vsel %vm426, %v276, %v288
        %v470 = vsel %vm439, %v459, %v302
        %v472 = vsel %vm439, %v462, %v303
        %v474 = vsel %vm439, %v465, %v304
        %v476 = vsel %vm439, %v468, %v300
        %v478 = vsel %vm448, %v470, %v314
        %v480 = vsel %vm448, %v472, %v315
        %v482 = vsel %vm448, %v474, %v316
        %v484 = vsel %vm448, %v476, %v312
        %v487 = vsel %vm426, %v326, %v347
        %v490 = vsel %vm426, %v327, %v353
        %v493 = vsel %vm426, %v328, %v354
        %v496 = vsel %vm426, %v324, %v351
        %v498 = vsel %vm439, %v487, %v366
        %v500 = vsel %vm439, %v490, %v372
        %v502 = vsel %vm439, %v493, %v373
        %v504 = vsel %vm439, %v496, %v370
        %v506 = vsel %vm448, %v498, %v376
        %v508 = vsel %vm448, %v500, %v382
        %v510 = vsel %vm448, %v502, %v383
        %v512 = vsel %vm448, %v504, %v380
        %v515 = vsel %vm426, %v393, %v400
        %v518 = vsel %vm426, %v394, %v401
        %v520 = vsel %vm426, %v395, %v278
        %v523 = vsel %vm426, %v391, %v272
        %v525 = vsel %vm439, %v515, %v411
        %v527 = vsel %vm439, %v518, %v412
        %v529 = vsel %vm439, %v520, %v413
        %v531 = vsel %vm439, %v523, %v409
        %v533 = vsel %vm448, %v525, %v423
        %v535 = vsel %vm448, %v527, %v424
        %v537 = vsel %vm448, %v529, %v425
        %v539 = vsel %vm448, %v531, %v421
        %540 = vrot.lane.b32.xlu0 %v228, 126
        %v541 = vpop.permute.xlu0 %540
        %542 = vrot.lane.b32.xlu0 %v229, 126
        %v543 = vpop.permute.xlu0 %542
        %544 = vrot.lane.b32.xlu0 %v219, 126
        %v545 = vpop.permute.xlu0 %544
        %v546 = vsel %vm252, %v541, %v543
        %v547 = vsel %vm252, %v543, %v247
        %v548 = vsel %vm252, %v247, %v545
        %549 = vrot.lane.b32.xlu0 %v363, 113
        %v550 = vpop.permute.xlu0 %549
        %551 = vrot.lane.b32.xlu0 %v344, 113
        %v552 = vpop.permute.xlu0 %551
        %553 = vrot.lane.b32.xlu0 %v364, 113
        %v554 = vpop.permute.xlu0 %553
        %vm555 = vcmask 924672
        %v556 = vsel %vm555, %v550, %v552
        %v557 = vsel %vm555, %v552, %v554
        %558 = vrot.lane.b32.xlu0 %v374, 110
        %v559 = vpop.permute.xlu0 %558
        %560 = vrot.lane.b32.xlu0 %v337, 110
        %v561 = vpop.permute.xlu0 %560
        %562 = vrot.lane.b32.xlu0 %v363, 110
        %v563 = vpop.permute.xlu0 %562
        %vm564 = vcmask 900096
        %v565 = vsel %vm564, %v559, %v561
        %v566 = vsel %vm564, %v561, %v563
        %v567 = vcombine.high %v344, %v344
        %568 = vrot.lane.b32.xlu0 %v344, 107
        %v569 = vpop.permute.xlu0 %568
        %570 = vrot.lane.b32.xlu0 %v567, 107
        %v571 = vpop.permute.xlu0 %570
        %572 = vrot.lane.b32.xlu0 %v362, 107
        %v573 = vpop.permute.xlu0 %572
        %v574 = vsel %vm392, %v569, %v571
        %v575 = vsel %vm392, %v571, %v573
        %576 = vrot.lane.b32.xlu0 %v228, 47
        %v577 = vpop.permute.xlu0 %576
        %578 = vrot.lane.b32.xlu0 %v229, 47
        %v579 = vpop.permute.xlu0 %578
        %580 = vrot.lane.b32.xlu0 %v211, 47
        %v581 = vpop.permute.xlu0 %580
        %582 = vrot.lane.b32.xlu0 %v219, 47
        %v583 = vpop.permute.xlu0 %582
        %vm584 = vcmask 384000
        %v585 = vsel %vm584, %v577, %v579
        %v586 = vsel %vm584, %v579, %v581
        %v587 = vsel %vm584, %v581, %v583
        %588 = vrot.lane.b32.xlu0 %v242, 44
        %v589 = vpop.permute.xlu0 %588
        %590 = vrot.lane.b32.xlu0 %v211, 44
        %v591 = vpop.permute.xlu0 %590
        %592 = vrot.lane.b32.xlu0 %v243, 44
        %v593 = vpop.permute.xlu0 %592
        %594 = vrot.lane.b32.xlu0 %v218, 44
        %v595 = vpop.permute.xlu0 %594
        %vm596 = vcmask 359424
        %v597 = vsel %vm596, %v589, %v591
        %v598 = vsel %vm596, %v591, %v593
        %v599 = vsel %vm596, %v593, %v595
        %600 = vrot.lane.b32.xlu0 %v256, 41
        %v601 = vpop.permute.xlu0 %600
        %602 = vrot.lane.b32.xlu0 %v228, 41
        %v603 = vpop.permute.xlu0 %602
        %604 = vrot.lane.b32.xlu0 %v242, 41
        %v605 = vpop.permute.xlu0 %604
        %606 = vrot.lane.b32.xlu0 %v211, 41
        %v607 = vpop.permute.xlu0 %606
        %vm608 = vcmask 334848
        %v609 = vsel %vm608, %v601, %v603
        %v610 = vsel %vm608, %v603, %v605
        %v611 = vsel %vm608, %v605, %v607
        %v613 = vcombine.high %v202, %v202
        %v615 = vunpack.c.l.s4 1983009808
        %v616 = vunpack.c.0.s8 %v615
        %v617 = vlaneseq
        %v618 = vshrl.u32 %v617, 7
        %v619 = vsub.s32 %v616, %v618
        %v620 = vrot.slane %v202, %v619
        %v622 = vunpack.c.l.s4 1983009808
        %v623 = vunpack.c.0.s8 %v622
        %v624 = vlaneseq
        %v625 = vshrl.u32 %v624, 7
        %v626 = vsub.s32 %v623, %v625
        %v627 = vrot.slane %v613, %v626
        %v628 = vcombine.high %v620, %v620
        %629 = vrot.lane.b32.xlu0 %v620, 109
        %v630 = vpop.permute.xlu0 %629
        %631 = vrot.lane.b32.xlu0 %v628, 109
        %v632 = vpop.permute.xlu0 %631
        %633 = vrot.lane.b32.xlu0 %v627, 109
        %v634 = vpop.permute.xlu0 %633
        %vm635 = vcmask 891904
        %v636 = vsel %vm635, %v630, %v632
        %v637 = vsel %vm635, %v632, %v634
        %v638 = vcombine.low %v202, %v202
        %v640 = vunpack.c.l.s4 1983009808
        %v641 = vunpack.c.0.s8 %v640
        %v642 = vlaneseq
        %v643 = vshrl.u32 %v642, 7
        %v644 = vsub.s32 %v641, %v643
        %v645 = vrot.slane %v638, %v644
        %v646 = vcombine.high %v645, %v645
        %647 = vrot.lane.b32.xlu0 %v645, 106
        %v648 = vpop.permute.xlu0 %647
        %649 = vrot.lane.b32.xlu0 %v646, 106
        %v650 = vpop.permute.xlu0 %649
        %651 = vrot.lane.b32.xlu0 %v620, 106
        %v652 = vpop.permute.xlu0 %651
        %v653 = vsel %vm265, %v648, %v650
        %v654 = vsel %vm265, %v650, %v652
        %v655 = vcombine.low %v620, %v620
        %v656 = vcombine.low %v627, %v627
        %657 = vrot.lane.b32.xlu0 %v655, 103
        %v658 = vpop.permute.xlu0 %657
        %659 = vrot.lane.b32.xlu0 %v620, 103
        %v660 = vpop.permute.xlu0 %659
        %661 = vrot.lane.b32.xlu0 %v656, 103
        %v662 = vpop.permute.xlu0 %661
        %v663 = vsel %vm410, %v658, %v660
        %v664 = vsel %vm410, %v660, %v662
        %v666 = vsel %vm426, %v211, %v546
        %v668 = vsel %vm426, %v219, %v547
        %v670 = vsel %vm426, %v218, %v548
        %v672 = vsel %vm426, %v220, %v545
        %v674 = vsel %vm439, %v666, %v550
        %v676 = vsel %vm439, %v668, %v556
        %v678 = vsel %vm439, %v670, %v557
        %v680 = vsel %vm439, %v672, %v554
        %v682 = vsel %vm448, %v674, %v559
        %v684 = vsel %vm448, %v676, %v565
        %v686 = vsel %vm448, %v678, %v566
        %v688 = vsel %vm448, %v680, %v563
        %v691 = vsel %vm426, %v569, %v577
        %v694 = vsel %vm426, %v574, %v585
        %v697 = vsel %vm426, %v575, %v586
        %v700 = vsel %vm426, %v573, %v587
        %v702 = vsel %vm439, %v691, %v589
        %v704 = vsel %vm439, %v694, %v597
        %v706 = vsel %vm439, %v697, %v598
        %v708 = vsel %vm439, %v700, %v599
        %v710 = vsel %vm448, %v702, %v601
        %v712 = vsel %vm448, %v704, %v609
        %v714 = vsel %vm448, %v706, %v610
        %v716 = vsel %vm448, %v708, %v611
        %v719 = vsel %vm426, %v630, %v648
        %v722 = vsel %vm426, %v636, %v653
        %v725 = vsel %vm426, %v637, %v654
        %v728 = vsel %vm426, %v634, %v652
        %v730 = vsel %vm439, %v719, %v658
        %v732 = vsel %vm439, %v722, %v663
        %v734 = vsel %vm439, %v725, %v664
        %v736 = vsel %vm439, %v728, %v662
        %749 = vrot.lane.b32.xlu0 %v682, 61
        %v750 = vpop.permute.xlu0 %749
        %751 = vrot.lane.b32.xlu0 %v684, 61
        %v752 = vpop.permute.xlu0 %751
        %753 = vrot.lane.b32.xlu0 %v686, 61
        %v754 = vpop.permute.xlu0 %753
        %755 = vrot.lane.b32.xlu0 %v688, 61
        %v756 = vpop.permute.xlu0 %755
        %757 = vrot.lane.b32.xlu0 %v710, 61
        %v758 = vpop.permute.xlu0 %757
        %759 = vrot.lane.b32.xlu0 %v712, 61
        %v760 = vpop.permute.xlu0 %759
        %761 = vrot.lane.b32.xlu0 %v714, 61
        %v762 = vpop.permute.xlu0 %761
        %763 = vrot.lane.b32.xlu0 %v716, 61
        %v764 = vpop.permute.xlu0 %763
        %765 = vrot.lane.b32.xlu0 %v730, 61
        %v766 = vpop.permute.xlu0 %765
        %767 = vrot.lane.b32.xlu0 %v732, 61
        %v768 = vpop.permute.xlu0 %767
        %769 = vrot.lane.b32.xlu0 %v734, 61
        %v770 = vpop.permute.xlu0 %769
        %771 = vrot.lane.b32.xlu0 %v736, 61
        %v772 = vpop.permute.xlu0 %771
        %vm773 = vcmask 498688
        %v774 = vsel %vm773, %v750, %v752
        %v775 = vsel %vm773, %v752, %v754
        %v776 = vsel %vm773, %v754, %v756
        %v777 = vsel %vm773, %v758, %v760
        %v778 = vsel %vm773, %v760, %v762
        %v779 = vsel %vm773, %v762, %v764
        %v780 = vsel %vm773, %v766, %v768
        %v781 = vsel %vm773, %v768, %v770
        %v782 = vsel %vm773, %v770, %v772
        %v783 = vld [vmem:[#allocation2] sm:$0xf]
        %v784 = vld [vmem:[#allocation2 + $0x4] sm:$0xf]
        %v785 = vld [vmem:[%s2] sm:$0xff]
        %v786 = vld [vmem:[%s2 + $0x8] sm:$0xff]
        %788 = vset.pattern.permute.xlu0 0
        %789 = vperm.xlu0 %788, %v785
        %v790 = vpop.permute.xlu0 %789
        %793 = vset.pattern.permute.xlu0 0
        %794 = vperm.xlu0 %793, %v786
        %v795 = vpop.permute.xlu0 %794
        %v799 = vunpack.c.l.b16 %v783
        %v800 = vunpack.c.l.b16 %v784
        %v801 = vpack.c.b16 %v800, %v799
        %818 = vrot.lane.b32.xlu0 %v450, 82
        %v819 = vpop.permute.xlu0 %818
        %820 = vrot.lane.b32.xlu0 %v452, 82
        %v821 = vpop.permute.xlu0 %820
        %822 = vrot.lane.b32.xlu0 %v454, 82
        %v823 = vpop.permute.xlu0 %822
        %824 = vrot.lane.b32.xlu0 %v456, 82
        %v825 = vpop.permute.xlu0 %824
        %826 = vrot.lane.b32.xlu0 %v478, 82
        %v827 = vpop.permute.xlu0 %826
        %828 = vrot.lane.b32.xlu0 %v480, 82
        %v829 = vpop.permute.xlu0 %828
        %830 = vrot.lane.b32.xlu0 %v482, 82
        %v831 = vpop.permute.xlu0 %830
        %832 = vrot.lane.b32.xlu0 %v484, 82
        %v833 = vpop.permute.xlu0 %832
        %834 = vrot.lane.b32.xlu0 %v506, 82
        %v835 = vpop.permute.xlu0 %834
        %836 = vrot.lane.b32.xlu0 %v508, 82
        %v837 = vpop.permute.xlu0 %836
        %838 = vrot.lane.b32.xlu0 %v510, 82
        %v839 = vpop.permute.xlu0 %838
        %840 = vrot.lane.b32.xlu0 %v512, 82
        %v841 = vpop.permute.xlu0 %840
        %842 = vrot.lane.b32.xlu0 %v533, 82
        %v843 = vpop.permute.xlu0 %842
        %844 = vrot.lane.b32.xlu0 %v535, 82
        %v845 = vpop.permute.xlu0 %844
        %846 = vrot.lane.b32.xlu0 %v537, 82
        %v847 = vpop.permute.xlu0 %846
        %848 = vrot.lane.b32.xlu0 %v539, 82
        %v849 = vpop.permute.xlu0 %848
        %850 = vrot.lane.b32.xlu0 %v774, 82
        %v851 = vpop.permute.xlu0 %850
        %852 = vrot.lane.b32.xlu0 %v775, 82
        %v853 = vpop.permute.xlu0 %852
        %854 = vrot.lane.b32.xlu0 %v776, 82
        %v855 = vpop.permute.xlu0 %854
        %856 = vrot.lane.b32.xlu0 %v756, 82
        %v857 = vpop.permute.xlu0 %856
        %858 = vrot.lane.b32.xlu0 %v777, 82
        %v859 = vpop.permute.xlu0 %858
        %860 = vrot.lane.b32.xlu0 %v778, 82
        %v861 = vpop.permute.xlu0 %860
        %862 = vrot.lane.b32.xlu0 %v779, 82
        %v863 = vpop.permute.xlu0 %862
        %864 = vrot.lane.b32.xlu0 %v764, 82
        %v865 = vpop.permute.xlu0 %864
        %866 = vrot.lane.b32.xlu0 %v780, 82
        %v867 = vpop.permute.xlu0 %866
        %868 = vrot.lane.b32.xlu0 %v781, 82
        %v869 = vpop.permute.xlu0 %868
        %870 = vrot.lane.b32.xlu0 %v782, 82
        %v871 = vpop.permute.xlu0 %870
        %872 = vrot.lane.b32.xlu0 %v772, 82
        %v873 = vpop.permute.xlu0 %872
        %v874 = vsel %vm325, %v819, %v821
        %v875 = vsel %vm325, %v821, %v823
        %v876 = vsel %vm325, %v823, %v825
        %v877 = vsel %vm325, %v827, %v829
        %v878 = vsel %vm325, %v829, %v831
        %v879 = vsel %vm325, %v831, %v833
        %v880 = vsel %vm325, %v835, %v837
        %v881 = vsel %vm325, %v837, %v839
        %v882 = vsel %vm325, %v839, %v841
        %v883 = vsel %vm325, %v843, %v845
        %v884 = vsel %vm325, %v845, %v847
        %v885 = vsel %vm325, %v847, %v849
        %v886 = vsel %vm325, %v851, %v853
        %v887 = vsel %vm325, %v853, %v855
        %v888 = vsel %vm325, %v855, %v857
        %v889 = vsel %vm325, %v859, %v861
        %v890 = vsel %vm325, %v861, %v863
        %v891 = vsel %vm325, %v863, %v865
        %v892 = vsel %vm325, %v867, %v869
        %v893 = vsel %vm325, %v869, %v871
        %v894 = vsel %vm325, %v871, %v873
        %vm913 = vcmask 883712
        %v915 = vsel %vm913, %v801, 0
        %v918 = vsel %vm448, %v892, 0
        %v921 = vsel %vm448, %v893, 0
        %v924 = vsel %vm448, %v894, 0
        %926 = vmatprep.subr.bf16.mxu0 0
        %927 = vmatpush1.bf16.msra.mxu0 0
        %928 = vmatprep.subr.bf16.mxu0 %v921
        %929 = vmatpush1.bf16.msra.mxu0 %v918
        %930 = vmatprep.subr.bf16.mxu0 %v890
        %931 = vmatpush1.bf16.msra.mxu0 %v889
        %932 = vmatprep.subr.bf16.mxu0 %v887
        %933 = vmatpush1.bf16.msra.mxu0 %v886
        %934 = vmatprep.subr.bf16.mxu0 %v884
        %935 = vmatpush1.bf16.msra.mxu0 %v883
        %936 = vmatprep.subr.bf16.mxu0 %v881
        %937 = vmatpush1.bf16.msra.mxu0 %v880
        %938 = vmatprep.subr.bf16.mxu0 %v878
        %939 = vmatpush1.bf16.msra.mxu0 %v877
        %940 = vmatprep.subr.bf16.mxu0 %v875
        %941 = vmatpush1.bf16.msra.mxu0 %v874
        %942 = vmatprep.subr.bf16.mxu0 0
        %943 = vmatpush2.bf16.msra.mxu0 0
        %944 = vmatprep.subr.bf16.mxu0 0
        %945 = vmatpush2.bf16.msra.mxu0 0
        %946 = vmatprep.subr.bf16.mxu0 0
        %947 = vmatpush2.bf16.msra.mxu0 0
        %948 = vmatprep.subr.bf16.mxu0 0
        %949 = vmatpush2.bf16.msra.mxu0 0
        %950 = vmatprep.subr.bf16.mxu0 0
        %951 = vmatpush2.bf16.msra.mxu0 0
        %952 = vmatprep.subr.bf16.mxu0 0
        %953 = vmatpush2.bf16.msra.mxu0 0
        %954 = vmatprep.subr.bf16.mxu0 0
        %955 = vmatpush2.bf16.msra.mxu0 0
        %956 = vmatprep.subr.bf16.mxu0 0
        %957 = vmatpush2.bf16.msra.mxu0 0
        %958 = vmatprep.mubr.bf16.mxu0 0
        %959 = vmatmul.mubr.bf16.gmra.mxu0 %v915
        %v960 = vpop.f32.mrf.mxu0
        %v961 = vadd.f32 %v790, %v960
        %v962 = vpop.f32.mrf.mxu0
        %v963 = vadd.f32 %v790, %v962
        %v964 = vpop.f32.mrf.mxu0
        %v965 = vadd.f32 %v795, %v964
        %v966 = vpop.f32.mrf.mxu0
        %v967 = vadd.f32 %v795, %v966
        %968 = vdwg.mxu0
        %969 = vmatprep.subr.bf16.mxu0 0
        %970 = vmatpush1.bf16.msra.mxu0 0
        %971 = vmatprep.subr.bf16.mxu0 0
        %972 = vmatpush1.bf16.msra.mxu0 %v924
        %973 = vmatprep.subr.bf16.mxu0 0
        %974 = vmatpush1.bf16.msra.mxu0 %v891
        %975 = vmatprep.subr.bf16.mxu0 0
        %976 = vmatpush1.bf16.msra.mxu0 %v888
        %977 = vmatprep.subr.bf16.mxu0 0
        %978 = vmatpush1.bf16.msra.mxu0 %v885
        %979 = vmatprep.subr.bf16.mxu0 0
        %980 = vmatpush1.bf16.msra.mxu0 %v882
        %981 = vmatprep.subr.bf16.mxu0 0
        %982 = vmatpush1.bf16.msra.mxu0 %v879
        %983 = vmatprep.subr.bf16.mxu0 0
        %984 = vmatpush1.bf16.msra.mxu0 %v876
        %985 = vmatprep.subr.bf16.mxu0 0
        %986 = vmatpush2.bf16.msra.mxu0 0
        %987 = vmatprep.subr.bf16.mxu0 0
        %988 = vmatpush2.bf16.msra.mxu0 0
        %989 = vmatprep.subr.bf16.mxu0 0
        %990 = vmatpush2.bf16.msra.mxu0 0
        %991 = vmatprep.subr.bf16.mxu0 0
        %992 = vmatpush2.bf16.msra.mxu0 0
        %993 = vmatprep.subr.bf16.mxu0 0
        %994 = vmatpush2.bf16.msra.mxu0 0
        %995 = vmatprep.subr.bf16.mxu0 0
        %996 = vmatpush2.bf16.msra.mxu0 0
        %997 = vmatprep.subr.bf16.mxu0 0
        %998 = vmatpush2.bf16.msra.mxu0 0
        %999 = vmatprep.subr.bf16.mxu0 0
        %1000 = vmatpush2.bf16.msra.mxu0 0
        %1001 = vmatprep.mubr.bf16.mxu0 0
        %1002 = vmatmul.mubr.bf16.gmra.mxu0 %v915
        %v1003 = vpop.f32.mrf.mxu0
        %v1004 = vadd.f32 %v790, %v1003
        %v1005 = vpop.f32.mrf.mxu0
        %v1006 = vpop.f32.mrf.mxu0
        %v1007 = vadd.f32 %v795, %v1006
        %v1008 = vpop.f32.mrf.mxu0
        %1009 = vdwg.mxu0
        %v1010 = vmax.f32 %v961, 0.0
        %v1011 = vmax.f32 %v963, 0.0
        %v1012 = vmax.f32 %v1004, 0.0
        %v1013 = vmax.f32 %v965, 0.0
        %v1014 = vmax.f32 %v967, 0.0
        %v1015 = vmax.f32 %v1007, 0.0
        %v1016 = vpack.c.bf16 %v1013, %v1010
        %v1017 = vpack.c.bf16 %v1014, %v1011
        %v1018 = vpack.c.bf16 %v1015, %v1012
        %v1022 = vunpack.c.l.b16 %v1016
        %v1023 = vunpack.c.l.b16 %v1017
        %v1024 = vunpack.c.l.b16 %v1018
        %v1025 = vunpack.c.h.b16 %v1016
        %v1026 = vunpack.c.h.b16 %v1017
        %v1027 = vunpack.c.h.b16 %v1018
        %v1028 = vpack.c.b16 %v1023, %v1022
        %v1029 = vpack.c.b16 %v1024, %v1024
        %v1030 = vpack.c.b16 %v1026, %v1025
        %v1031 = vpack.c.b16 %v1027, %v1027
        %1036 = vst [vmem:[%s192] sm:$0xff] %v1028
        %vm1037 = vcmask 781312
        %1038 = vst.msk [vmem:[%s192 + $0x8] sm:$0xf] %vm1037, %v1029
        %1039 = vst [vmem:[%s192 + $0xc] sm:$0xff] %v1030
        %1040 = vst.msk [vmem:[%s192 + $0x14] sm:$0xf] %vm1037, %v1031
        %s1041 = sand.u32 %s108, 1
        %s1042 = scalar_lea.sflag [#allocation4], %s1041
        %s1043 = sand.u32 %s108, 1
        %s1044 = smul.addr %s1043, 24
        %s1045 = scalar_lea.vmem [#allocation5], %s1044
        // Predicated region
        $region37: #{tpu_custom_call.1} parent=31 // pred_check
          %p1046 = pneg %p118
        $region38: #{tpu_custom_call.1} parent=31 // pred_check_branch
          %1048 = sbr.rel (%p1046) target = $region40
        $region39: #{tpu_custom_call.1} parent=31 // pred_region
          %s1049 = smul.u32 3, %s23
          %s1051 = ssub.s32 384, 384
          %1052 = vsyncadd %s1042, %s1051
          %s1053 = smul.addr %s22, 6
          %s1054 = sadd.s32 %s1049, %s1053
          %s1055 = smul.addr %s1054, 64
          %s1056 = scalar_lea.hbm %s3, %s1055
          %s1057 = sshll.u32 %s1045, 4
          %s1058 = int_to_ptr.vmem [resolvable:$true] %s1057
          %1063 = dma.vmem_to_hbm [thread:$0]  %s1058, 384, %s1056, %s1042, 192, 192, 12
        $region40: #{tpu_custom_call.1} parent=31 // pred_fallthru
          _
      $region32: #{tpu_custom_call.1} parent=5 // pred_fallthru
        _
      %p1064 = scmp.le.s32.totalorder 2, %s13
      // Predicated region
      $region41: #{tpu_custom_call.1} parent=5 // pred_check
        %p1065 = pneg %p1064
      $region42: #{tpu_custom_call.1} parent=5 // pred_check_branch
        %1067 = sbr.rel (%p1065) target = $region44
      $region43: #{tpu_custom_call.1} parent=5 // pred_region
        %s1068 = ssub.s32 %s13, 2
        // Predicated region
        $region45: #{tpu_custom_call.1} parent=43 // pred_check
          %p1069 = pneg %p124
        $region46: #{tpu_custom_call.1} parent=43 // pred_check_branch
          %1071 = sbr.rel (%p1069) target = $region48
        $region47: #{tpu_custom_call.1} parent=43 // pred_region
          %s1072 = sand.u32 %s109, 1
          %s1073 = scalar_lea.sflag [#allocation4], %s1072
          %s1074 = sand.u32 %s109, 1
          %s1075 = smul.addr %s1074, 24
          %s1076 = scalar_lea.vmem [#allocation5], %s1075
          %1077 = dma.done %s1073, 384
        $region48: #{tpu_custom_call.1} parent=43 // pred_fallthru
          _
      $region44: #{tpu_custom_call.1} parent=5 // pred_fallthru
        _
    $region6: #{tpu_custom_call.1} parent=1 // loop_footer
      %s17 = sadd.s32 1, %s13
    $region7: #{tpu_custom_call.1} parent=1 // loop_footer_branch
      %12 = sbr.rel target = $region3
    $region8: #{tpu_custom_call.1} parent=1 // loop_exit
      _
    %1078 = vsyncpa [#allocation3], 1
    %s1079 = scalar_lea.sflag [#allocation3], 1
    %1080 = vsyncpa %s1079, 1
    %1081 = vsyncpa [#allocation4], 1
    %s1082 = scalar_lea.sflag [#allocation4], 1
    %1083 = vsyncpa %s1082, 1

</llo_original>
